<compile_context>
chip_gen: v7x
topology: tpu7x:2x2x1
jax: 0.10.0
libtpu: 0.0.40
codegen_flags: <defaults>
</compile_context>

<pallas_src>
from functools import partial

import jax
import jax.numpy as jnp
from jax.experimental import pallas as pl
from jax.experimental.pallas import tpu as pltpu

_LANES = 128


def _dma_copy_kernel(x_hbm_ref, o_hbm_ref, sem):
    # Pure data movement (the forced "view" materialization): one HBM->HBM DMA.
    cp = pltpu.make_async_copy(x_hbm_ref, o_hbm_ref, sem)
    cp.start()
    cp.wait()


def _view_copy_2d(x2d):
    nbytes = x2d.size * x2d.dtype.itemsize
    return pl.pallas_call(
        _dma_copy_kernel,
        out_shape=jax.ShapeDtypeStruct(x2d.shape, x2d.dtype),
        # Raw HBM refs on both sides -> no auto HBM<->VMEM staging.
        in_specs=[pl.BlockSpec(memory_space=pl.ANY)],
        out_specs=pl.BlockSpec(memory_space=pl.ANY),
        scratch_shapes=[pltpu.SemaphoreType.DMA(())],
        # Advisory: zero compute, read + write of the slab.
        cost_estimate=pl.CostEstimate(
            flops=0, transcendentals=0, bytes_accessed=2 * nbytes
        ),
    )(x2d)


@partial(jax.jit, static_argnums=(1, 2, 3))
def shufflenet_view(x227, x220=1, x222=14, x223=14):
    """Equivalent of M.forward: x227.view(x220, -1, x222, x223)."""
    total = x227.size
    inferred_c = total // (x220 * x222 * x223)  # the -1 in torch .view

    # TODO(synk): in a real pipeline this op should be fused into the
    # producer/consumer kernel (or left as a pure reshape) -- it is
    # metadata-only; the pallas_call exists only because a standalone kernel
    # is required.
    if total % _LANES == 0:
        # Lane-dense contiguous slab: (539, 128) for the reference shape.
        x2d = x227.reshape(total // _LANES, _LANES)
    else:
        # Contiguous single-row slab; the HBM->HBM DMA is lane-agnostic, so
        # this avoids any masked partial-store / padding concerns.
        x2d = x227.reshape(1, total)

    out2d = _view_copy_2d(x2d)
    return out2d.reshape(x220, inferred_c, x222, x223)


if __name__ == "__main__":
    key = jax.random.PRNGKey(0)
    # Shape taken directly from the module: x227 = randn([1, 176, 2, 14, 14])
    x227 = jax.random.normal(key, (1, 176, 2, 14, 14), dtype=jnp.float32)

    # Pure-JAX reference of torch's .view semantics.
    ref = jnp.reshape(x227, (1, -1, 14, 14))

    out = shufflenet_view(x227, 1, 14, 14)
    out = jax.block_until_ready(out)

    assert out.shape == (1, 352, 14, 14), out.shape
    assert out.dtype == x227.dtype
    assert bool(jnp.array_equal(out, ref))

    print("KERNEL_OK")
</pallas_src>

<mosaic_0001>
module attributes {stable_mosaic.version = 11 : i64} {
  func.func @_dma_copy_kernel(%arg0: memref<539x128xf32, #tpu.memory_space<any>>, %arg1: memref<539x128xf32, #tpu.memory_space<any>>, %arg2: memref<!tpu.dma_semaphore, #tpu.memory_space<semaphore_mem>>) attributes {dimension_semantics = [], scalar_prefetch = 0 : i64, scratch_operands = 1 : i64, tpu.core_type = #tpu.core_type<tc>} {
    tpu.enqueue_dma source(%arg0 : memref<539x128xf32, #tpu.memory_space<any>>) target(%arg1 : memref<539x128xf32, #tpu.memory_space<any>>) target_semaphore(%arg2 : memref<!tpu.dma_semaphore, #tpu.memory_space<semaphore_mem>>)
    tpu.wait_dma2 semaphore(%arg2 : memref<!tpu.dma_semaphore, #tpu.memory_space<semaphore_mem>>) src(%arg0 : memref<539x128xf32, #tpu.memory_space<any>>) dst(%arg1 : memref<539x128xf32, #tpu.memory_space<any>>)
    return
  }
}

</mosaic_0001>

<llo_original>
// kernel: shufflenet_view.1
$region0: #{shufflenet_view.1}
  #allocation0 [shape = 'u32[]', space=smem, size = 0x4, offset = 0x4, fixed_abs, tag = 'smem constant byte address 0x4 - core index']
  #allocation1 [shape = 'u32[144,128]{1,0:T(1,128)}', space=vmem, size = 0x12000, scoped, tag = 'internal scratch']
  #allocation2 [shape = 's32[1]{0}', space=sflag, size = 0x4, scoped, tag = 'scratch operand']
  #allocation3 [shape = 's32[]', space=sflag, size = 0x4, offset = 0, fixed_abs, tag = 'sflag constant byte address 0x0 - dummy sync flag']
  %s0 = inlined_call_operand.vmem [shape: f32[539,128], index: 0, kind: input, shape index: {}]
  %s1 = inlined_call_operand.vmem [shape: f32[539,128], index: 1, kind: output, shape index: {}]
  %s2 = sld [smem:[#allocation0]]
  $region39: #{shufflenet_view.1} parent=0
    _
  %s4 = ssub.s32 1, %s2
  %s5 = scalar_select 0, %s4, %s2
  %p7 = scmp.lt.u32.totalorder 539, 8
  %p8 = pneg %p7
  // Predicated region
  $region2: #{shufflenet_view.1} parent=0 // pred_check
    _
  $region3: #{shufflenet_view.1} parent=0 // pred_check_branch
    %10 = sbr.rel (%p7) target = $region5
  $region4: #{shufflenet_view.1} parent=0 // pred_region
    %s25 = sand.u32 539, 7
    %p26 = scmp.eq.s32.totalorder %s25, 0
    %p27 = pneg %p26
    // Predicated region
    $region17: #{shufflenet_view.1} parent=4 // pred_check
      _
    $region18: #{shufflenet_view.1} parent=4 // pred_check_branch
      %29 = sbr.rel (%p26) target = $region20
    $region19: #{shufflenet_view.1} parent=4 // pred_region
      %s30 = sand.u32 539, 7
      %s31 = ssub.s32 539, %s30
      %s32 = scalar_lea.vmem %s0, %s31
      %s33 = ssub.s32 539, %s30
      %s34 = scalar_lea.vmem %s1, %s33
      loop: start=0, step=1, limit=1
      $region21: #{shufflenet_view.1} parent=19 // loop_pre_header
        _
      $region22: #{shufflenet_view.1} parent=19 // loop_header
        %s36 = sphi 0, %s40
        %p37 = scmp.ge.s32.totalorder %s36, 1
        %s41 = sphi %s0, %s0
        %s42 = sphi %s1, %s1
      $region23: #{shufflenet_view.1} parent=19 // loop_header_branch
        %39 = sbr.rel (%p37) target = $region27
      $region24: #{shufflenet_view.1} parent=19 // loop_body
        %v43 = vld [vmem:[%s41] sm:$0xff]
        %44 = vst [vmem:[%s42] sm:$0xff] %v43
        %v45 = vld [vmem:[%s41 + $0x8] sm:$0xff]
        %46 = vst [vmem:[%s42 + $0x8] sm:$0xff] %v45
        %v47 = vld [vmem:[%s41 + $0x10] sm:$0xff]
        %48 = vst [vmem:[%s42 + $0x10] sm:$0xff] %v47
        %v49 = vld [vmem:[%s41 + $0x18] sm:$0xff]
        %50 = vst [vmem:[%s42 + $0x18] sm:$0xff] %v49
        %v51 = vld [vmem:[%s41 + $0x20] sm:$0xff]
        %52 = vst [vmem:[%s42 + $0x20] sm:$0xff] %v51
        %v53 = vld [vmem:[%s41 + $0x28] sm:$0xff]
        %54 = vst [vmem:[%s42 + $0x28] sm:$0xff] %v53
        %v55 = vld [vmem:[%s41 + $0x30] sm:$0xff]
        %56 = vst [vmem:[%s42 + $0x30] sm:$0xff] %v55
        %v57 = vld [vmem:[%s41 + $0x38] sm:$0xff]
        %58 = vst [vmem:[%s42 + $0x38] sm:$0xff] %v57
        %v59 = vld [vmem:[%s41 + $0x40] sm:$0xff]
        %60 = vst [vmem:[%s42 + $0x40] sm:$0xff] %v59
        %v61 = vld [vmem:[%s41 + $0x48] sm:$0xff]
        %62 = vst [vmem:[%s42 + $0x48] sm:$0xff] %v61
        %v63 = vld [vmem:[%s41 + $0x50] sm:$0xff]
        %64 = vst [vmem:[%s42 + $0x50] sm:$0xff] %v63
        %v65 = vld [vmem:[%s41 + $0x58] sm:$0xff]
        %66 = vst [vmem:[%s42 + $0x58] sm:$0xff] %v65
        %v67 = vld [vmem:[%s41 + $0x60] sm:$0xff]
        %68 = vst [vmem:[%s42 + $0x60] sm:$0xff] %v67
        %v69 = vld [vmem:[%s41 + $0x68] sm:$0xff]
        %70 = vst [vmem:[%s42 + $0x68] sm:$0xff] %v69
        %v71 = vld [vmem:[%s41 + $0x70] sm:$0xff]
        %72 = vst [vmem:[%s42 + $0x70] sm:$0xff] %v71
        %v73 = vld [vmem:[%s41 + $0x78] sm:$0xff]
        %74 = vst [vmem:[%s42 + $0x78] sm:$0xff] %v73
        %v75 = vld [vmem:[%s41 + $0x80] sm:$0xff]
        %76 = vst [vmem:[%s42 + $0x80] sm:$0xff] %v75
        %v77 = vld [vmem:[%s41 + $0x88] sm:$0xff]
        %78 = vst [vmem:[%s42 + $0x88] sm:$0xff] %v77
        %v79 = vld [vmem:[%s41 + $0x90] sm:$0xff]
        %80 = vst [vmem:[%s42 + $0x90] sm:$0xff] %v79
        %v81 = vld [vmem:[%s41 + $0x98] sm:$0xff]
        %82 = vst [vmem:[%s42 + $0x98] sm:$0xff] %v81
        %v83 = vld [vmem:[%s41 + $0xa0] sm:$0xff]
        %84 = vst [vmem:[%s42 + $0xa0] sm:$0xff] %v83
        %v85 = vld [vmem:[%s41 + $0xa8] sm:$0xff]
        %86 = vst [vmem:[%s42 + $0xa8] sm:$0xff] %v85
        %v87 = vld [vmem:[%s41 + $0xb0] sm:$0xff]
        %88 = vst [vmem:[%s42 + $0xb0] sm:$0xff] %v87
        %v89 = vld [vmem:[%s41 + $0xb8] sm:$0xff]
        %90 = vst [vmem:[%s42 + $0xb8] sm:$0xff] %v89
        %v91 = vld [vmem:[%s41 + $0xc0] sm:$0xff]
        %92 = vst [vmem:[%s42 + $0xc0] sm:$0xff] %v91
        %v93 = vld [vmem:[%s41 + $0xc8] sm:$0xff]
        %94 = vst [vmem:[%s42 + $0xc8] sm:$0xff] %v93
        %v95 = vld [vmem:[%s41 + $0xd0] sm:$0xff]
        %96 = vst [vmem:[%s42 + $0xd0] sm:$0xff] %v95
        %v97 = vld [vmem:[%s41 + $0xd8] sm:$0xff]
        %98 = vst [vmem:[%s42 + $0xd8] sm:$0xff] %v97
        %v99 = vld [vmem:[%s41 + $0xe0] sm:$0xff]
        %100 = vst [vmem:[%s42 + $0xe0] sm:$0xff] %v99
        %v101 = vld [vmem:[%s41 + $0xe8] sm:$0xff]
        %102 = vst [vmem:[%s42 + $0xe8] sm:$0xff] %v101
        %v103 = vld [vmem:[%s41 + $0xf0] sm:$0xff]
        %104 = vst [vmem:[%s42 + $0xf0] sm:$0xff] %v103
        %v105 = vld [vmem:[%s41 + $0xf8] sm:$0xff]
        %106 = vst [vmem:[%s42 + $0xf8] sm:$0xff] %v105
        %v107 = vld [vmem:[%s41 + $0x100] sm:$0xff]
        %108 = vst [vmem:[%s42 + $0x100] sm:$0xff] %v107
        %v109 = vld [vmem:[%s41 + $0x108] sm:$0xff]
        %110 = vst [vmem:[%s42 + $0x108] sm:$0xff] %v109
        %v111 = vld [vmem:[%s41 + $0x110] sm:$0xff]
        %112 = vst [vmem:[%s42 + $0x110] sm:$0xff] %v111
        %v113 = vld [vmem:[%s41 + $0x118] sm:$0xff]
        %114 = vst [vmem:[%s42 + $0x118] sm:$0xff] %v113
        %v115 = vld [vmem:[%s41 + $0x120] sm:$0xff]
        %116 = vst [vmem:[%s42 + $0x120] sm:$0xff] %v115
        %v117 = vld [vmem:[%s41 + $0x128] sm:$0xff]
        %118 = vst [vmem:[%s42 + $0x128] sm:$0xff] %v117
        %v119 = vld [vmem:[%s41 + $0x130] sm:$0xff]
        %120 = vst [vmem:[%s42 + $0x130] sm:$0xff] %v119
        %v121 = vld [vmem:[%s41 + $0x138] sm:$0xff]
        %122 = vst [vmem:[%s42 + $0x138] sm:$0xff] %v121
        %v123 = vld [vmem:[%s41 + $0x140] sm:$0xff]
        %124 = vst [vmem:[%s42 + $0x140] sm:$0xff] %v123
        %v125 = vld [vmem:[%s41 + $0x148] sm:$0xff]
        %126 = vst [vmem:[%s42 + $0x148] sm:$0xff] %v125
        %v127 = vld [vmem:[%s41 + $0x150] sm:$0xff]
        %128 = vst [vmem:[%s42 + $0x150] sm:$0xff] %v127
        %v129 = vld [vmem:[%s41 + $0x158] sm:$0xff]
        %130 = vst [vmem:[%s42 + $0x158] sm:$0xff] %v129
        %v131 = vld [vmem:[%s41 + $0x160] sm:$0xff]
        %132 = vst [vmem:[%s42 + $0x160] sm:$0xff] %v131
        %v133 = vld [vmem:[%s41 + $0x168] sm:$0xff]
        %134 = vst [vmem:[%s42 + $0x168] sm:$0xff] %v133
        %v135 = vld [vmem:[%s41 + $0x170] sm:$0xff]
        %136 = vst [vmem:[%s42 + $0x170] sm:$0xff] %v135
        %v137 = vld [vmem:[%s41 + $0x178] sm:$0xff]
        %138 = vst [vmem:[%s42 + $0x178] sm:$0xff] %v137
        %v139 = vld [vmem:[%s41 + $0x180] sm:$0xff]
        %140 = vst [vmem:[%s42 + $0x180] sm:$0xff] %v139
        %v141 = vld [vmem:[%s41 + $0x188] sm:$0xff]
        %142 = vst [vmem:[%s42 + $0x188] sm:$0xff] %v141
        %v143 = vld [vmem:[%s41 + $0x190] sm:$0xff]
        %144 = vst [vmem:[%s42 + $0x190] sm:$0xff] %v143
        %v145 = vld [vmem:[%s41 + $0x198] sm:$0xff]
        %146 = vst [vmem:[%s42 + $0x198] sm:$0xff] %v145
        %v147 = vld [vmem:[%s41 + $0x1a0] sm:$0xff]
        %148 = vst [vmem:[%s42 + $0x1a0] sm:$0xff] %v147
        %v149 = vld [vmem:[%s41 + $0x1a8] sm:$0xff]
        %150 = vst [vmem:[%s42 + $0x1a8] sm:$0xff] %v149
        %v151 = vld [vmem:[%s41 + $0x1b0] sm:$0xff]
        %152 = vst [vmem:[%s42 + $0x1b0] sm:$0xff] %v151
        %v153 = vld [vmem:[%s41 + $0x1b8] sm:$0xff]
        %154 = vst [vmem:[%s42 + $0x1b8] sm:$0xff] %v153
        %v155 = vld [vmem:[%s41 + $0x1c0] sm:$0xff]
        %156 = vst [vmem:[%s42 + $0x1c0] sm:$0xff] %v155
        %v157 = vld [vmem:[%s41 + $0x1c8] sm:$0xff]
        %158 = vst [vmem:[%s42 + $0x1c8] sm:$0xff] %v157
        %v159 = vld [vmem:[%s41 + $0x1d0] sm:$0xff]
        %160 = vst [vmem:[%s42 + $0x1d0] sm:$0xff] %v159
        %v161 = vld [vmem:[%s41 + $0x1d8] sm:$0xff]
        %162 = vst [vmem:[%s42 + $0x1d8] sm:$0xff] %v161
        %v163 = vld [vmem:[%s41 + $0x1e0] sm:$0xff]
        %164 = vst [vmem:[%s42 + $0x1e0] sm:$0xff] %v163
        %v165 = vld [vmem:[%s41 + $0x1e8] sm:$0xff]
        %166 = vst [vmem:[%s42 + $0x1e8] sm:$0xff] %v165
        %v167 = vld [vmem:[%s41 + $0x1f0] sm:$0xff]
        %168 = vst [vmem:[%s42 + $0x1f0] sm:$0xff] %v167
        %v169 = vld [vmem:[%s41 + $0x1f8] sm:$0xff]
        %170 = vst [vmem:[%s42 + $0x1f8] sm:$0xff] %v169
        %v171 = vld [vmem:[%s41 + $0x200] sm:$0xff]
        %172 = vst [vmem:[%s42 + $0x200] sm:$0xff] %v171
        %v173 = vld [vmem:[%s41 + $0x208] sm:$0xff]
        %174 = vst [vmem:[%s42 + $0x208] sm:$0xff] %v173
        %v175 = vld [vmem:[%s41 + $0x210] sm:$0xff]
        %176 = vst [vmem:[%s42 + $0x210] sm:$0xff] %v175
      $region25: #{shufflenet_view.1} parent=19 // loop_footer
        %s40 = sadd.s32 1, %s36
      $region26: #{shufflenet_view.1} parent=19 // loop_footer_branch
        %35 = sbr.rel target = $region22
      $region27: #{shufflenet_view.1} parent=19 // loop_exit
        _
      %s177 = sshllo.u32 0, %s30
      loop: start=0, step=1, limit=1
      $region28: #{shufflenet_view.1} parent=19 // loop_pre_header
        _
      $region29: #{shufflenet_view.1} parent=19 // loop_header
        %s179 = sphi 0, %s183
        %p180 = scmp.ge.s32.totalorder %s179, 1
        %s184 = sphi %s32, %s32
        %s185 = sphi %s34, %s34
      $region30: #{shufflenet_view.1} parent=19 // loop_header_branch
        %182 = sbr.rel (%p180) target = $region34
      $region31: #{shufflenet_view.1} parent=19 // loop_body
        %v186 = vld [vmem:[%s184] sm:%s177]
        %187 = vst [vmem:[%s185] sm:%s177] %v186
      $region32: #{shufflenet_view.1} parent=19 // loop_footer
        %s183 = sadd.s32 1, %s179
      $region33: #{shufflenet_view.1} parent=19 // loop_footer_branch
        %178 = sbr.rel target = $region29
      $region34: #{shufflenet_view.1} parent=19 // loop_exit
        _
    $region20: #{shufflenet_view.1} parent=4 // pred_fallthru
      _
  $region5: #{shufflenet_view.1} parent=0 // pred_fallthru
    _
  // Predicated region
  $region6: #{shufflenet_view.1} parent=0 // pred_check
    %p11 = pneg %p7
  $region7: #{shufflenet_view.1} parent=0 // pred_check_branch
    %13 = sbr.rel (%p11) target = $region9
  $region8: #{shufflenet_view.1} parent=0 // pred_region
    %s14 = sshllo.u32 0, 539
    loop: start=0, step=1, limit=1
    $region10: #{shufflenet_view.1} parent=8 // loop_pre_header
      _
    $region11: #{shufflenet_view.1} parent=8 // loop_header
      %s16 = sphi 0, %s20
      %p17 = scmp.ge.s32.totalorder %s16, 1
      %s21 = sphi %s0, %s0
      %s22 = sphi %s1, %s1
    $region12: #{shufflenet_view.1} parent=8 // loop_header_branch
      %19 = sbr.rel (%p17) target = $region16
    $region13: #{shufflenet_view.1} parent=8 // loop_body
      %v23 = vld [vmem:[%s21] sm:%s14]
      %24 = vst [vmem:[%s22] sm:%s14] %v23
    $region14: #{shufflenet_view.1} parent=8 // loop_footer
      %s20 = sadd.s32 1, %s16
    $region15: #{shufflenet_view.1} parent=8 // loop_footer_branch
      %15 = sbr.rel target = $region11
    $region16: #{shufflenet_view.1} parent=8 // loop_exit
      _
  $region9: #{shufflenet_view.1} parent=0 // pred_fallthru
    _
  // Predicated region
  $region35: #{shufflenet_view.1} parent=0 // pred_check
    _
  $region36: #{shufflenet_view.1} parent=0 // pred_check_branch
    %190 = sbr.rel (0) target = $region38
  $region37: #{shufflenet_view.1} parent=0 // pred_region
    %191 = vsyncadd [#allocation2], 8624
  $region38: #{shufflenet_view.1} parent=0 // pred_fallthru
    _
  %s192 = smul.u32 539, 1
  %s193 = sshll.u32 %s192, 4
  %194 = dma.done [#allocation2], %s193
  %195 = vsyncmov [#allocation2]
  %s196 = vpop.sfrf %195
  %p197 = scmp.eq.s32.totalorder %s196, 0
  %p198 = pneg %p197
  %200 = shalt.err (%p198)

</llo_original>
